<compile_context>
chip_gen: v7x
topology: tpu7x:2x2x1
jax: 0.10.0
libtpu: 0.0.40
codegen_flags: <defaults>
</compile_context>

<pallas_src>
import jax
import jax.numpy as jnp
from jax.experimental import pallas as pl
from jax.experimental.pallas import tpu as pltpu

INPUT_SIZE = 28 * 28          # 784
PADDED_INPUT = 896            # 784 rounded up to a multiple of 128
HIDDEN_SIZE = 128
LATENT_SIZE = 16
FUSED_OUT = 2 * LATENT_SIZE   # mu ++ sigma -> one 32-lane output
TILE_B_MAX = 512              # batch tile; bf16 x-tile 512x896 ~= 0.9 MiB


def _round_up(n, m):
    return ((n + m - 1) // m) * m


def encoder_kernel(x_ref, w1_ref, b1_ref, wh_ref, bh_ref, out_ref):
    # First layer: bf16 MXU matmul with f32 accumulation.
    h = jnp.dot(x_ref[...], w1_ref[...], preferred_element_type=jnp.float32)
    # Bias add + ReLU in f32 on the VPU (no bf16 elementwise -> v5e-safe).
    h = jnp.maximum(h + b1_ref[...], 0.0)
    # Fused mu/sigma heads: one MXU push, one lane-dense (32-lane) store.
    out = jnp.dot(h.astype(jnp.bfloat16), wh_ref[...],
                  preferred_element_type=jnp.float32)
    out_ref[...] = out + bh_ref[...]


def encoder_forward(x, w1, b1, wh, bh):
    """x: [B, PADDED_INPUT] bf16 -> (mu, sigma), each [B, LATENT_SIZE] f32."""
    B = x.shape[0]
    tile_b = min(TILE_B_MAX, _round_up(B, 16))      # multiple of 16 (bf16 sublane pack)
    b_pad = _round_up(B, tile_b)
    if b_pad != B:
        x = jnp.pad(x, ((0, b_pad - B), (0, 0)))
    grid = (b_pad // tile_b,)

    cost = pl.CostEstimate(
        flops=2 * b_pad * PADDED_INPUT * HIDDEN_SIZE
        + 2 * b_pad * HIDDEN_SIZE * FUSED_OUT,
        transcendentals=0,
        bytes_accessed=(x.size * x.dtype.itemsize
                        + w1.size * w1.dtype.itemsize
                        + b1.size * b1.dtype.itemsize
                        + wh.size * wh.dtype.itemsize
                        + bh.size * bh.dtype.itemsize
                        + b_pad * FUSED_OUT * 4),
    )

    out = pl.pallas_call(
        encoder_kernel,
        out_shape=jax.ShapeDtypeStruct((b_pad, FUSED_OUT), jnp.float32),
        grid=grid,
        in_specs=[
            pl.BlockSpec((tile_b, PADDED_INPUT), lambda i: (i, 0)),        # x tile
            pl.BlockSpec((PADDED_INPUT, HIDDEN_SIZE), lambda i: (0, 0)),   # W1 (resident)
            pl.BlockSpec((1, HIDDEN_SIZE), lambda i: (0, 0)),              # b1
            pl.BlockSpec((HIDDEN_SIZE, FUSED_OUT), lambda i: (0, 0)),      # W_mu||W_sigma
            pl.BlockSpec((1, FUSED_OUT), lambda i: (0, 0)),                # b_mu||b_sigma
        ],
        out_specs=pl.BlockSpec((tile_b, FUSED_OUT), lambda i: (i, 0)),
        compiler_params=pltpu.CompilerParams(
            dimension_semantics=("parallel",)),
        cost_estimate=cost,
    )(x, w1, b1, wh, bh)

    # Free XLA slices in the wrapper: split fused head + drop batch padding.
    mu = out[:B, :LATENT_SIZE]
    sigma = out[:B, LATENT_SIZE:]
    return mu, sigma


def init_params(key):
    """torch.nn.Linear-style init (uniform +-1/sqrt(fan_in)), weights stored
    transposed as [fan_in, fan_out], biases [1, fan_out]."""
    ks = jax.random.split(key, 6)

    def linear(kw, kb, fan_in, fan_out):
        bound = 1.0 / jnp.sqrt(fan_in)
        w = jax.random.uniform(kw, (fan_in, fan_out), jnp.float32, -bound, bound)
        b = jax.random.uniform(kb, (1, fan_out), jnp.float32, -bound, bound)
        return w, b

    w1, b1 = linear(ks[0], ks[1], INPUT_SIZE, HIDDEN_SIZE)
    wmu, bmu = linear(ks[2], ks[3], HIDDEN_SIZE, LATENT_SIZE)
    wsig, bsig = linear(ks[4], ks[5], HIDDEN_SIZE, LATENT_SIZE)
    return w1, b1, wmu, bmu, wsig, bsig


def pack_params(w1, b1, wmu, bmu, wsig, bsig):
    """Pad W1's contraction dim to 896, fuse the two heads, cast MXU operands
    to bf16 (biases stay f32)."""
    w1_p = jnp.pad(w1, ((0, PADDED_INPUT - INPUT_SIZE), (0, 0))).astype(jnp.bfloat16)
    wh = jnp.concatenate([wmu, wsig], axis=1).astype(jnp.bfloat16)
    bh = jnp.concatenate([bmu, bsig], axis=1)
    return w1_p, b1, wh, bh


if __name__ == "__main__":
    key = jax.random.PRNGKey(0)
    k_x, k_p = jax.random.split(key)

    B = 8  # small batch
    x = jax.random.normal(k_x, (B, INPUT_SIZE), jnp.float32)
    w1, b1, wmu, bmu, wsig, bsig = init_params(k_p)
    w1_p, b1_p, wh, bh = pack_params(w1, b1, wmu, bmu, wsig, bsig)

    # Kernel input: zero-pad features 784 -> 896 and store in bf16.
    x_p = jnp.pad(x, ((0, 0), (0, PADDED_INPUT - INPUT_SIZE))).astype(jnp.bfloat16)

    mu, sigma = jax.jit(encoder_forward)(x_p, w1_p, b1_p, wh, bh)
    jax.block_until_ready((mu, sigma))

    # Plain-JAX reference with identical bf16 rounding of the MXU operands.
    f32 = jnp.float32
    hi = jax.lax.Precision.HIGHEST
    xq = x.astype(jnp.bfloat16).astype(f32)
    w1q = w1.astype(jnp.bfloat16).astype(f32)
    h_ref = jnp.maximum(jnp.dot(xq, w1q, precision=hi) + b1, 0.0)
    hq = h_ref.astype(jnp.bfloat16).astype(f32)
    mu_ref = jnp.dot(hq, wmu.astype(jnp.bfloat16).astype(f32), precision=hi) + bmu
    sigma_ref = jnp.dot(hq, wsig.astype(jnp.bfloat16).astype(f32), precision=hi) + bsig

    assert mu.shape == (B, LATENT_SIZE) and sigma.shape == (B, LATENT_SIZE)
    assert jnp.allclose(mu, mu_ref, atol=1e-4, rtol=1e-4)
    assert jnp.allclose(sigma, sigma_ref, atol=1e-4, rtol=1e-4)

    print("KERNEL_OK")
</pallas_src>

<mosaic_0001>
module attributes {stable_mosaic.version = 11 : i64} {
  func.func @encoder_kernel(%arg0: i32, %arg1: memref<16x896xbf16, #tpu.memory_space<vmem>>, %arg2: memref<896x128xbf16, #tpu.memory_space<vmem>>, %arg3: memref<1x128xf32, #tpu.memory_space<vmem>>, %arg4: memref<128x32xbf16, #tpu.memory_space<vmem>>, %arg5: memref<1x32xf32, #tpu.memory_space<vmem>>, %arg6: memref<16x32xf32, #tpu.memory_space<vmem>>) attributes {dimension_semantics = [#tpu.dimension_semantics<parallel>], iteration_bounds = array<i64: 1>, scalar_prefetch = 0 : i64, scratch_operands = 0 : i64, tpu.core_type = #tpu.core_type<tc>, window_params = [{transform_indices = @transform_0, window_bounds = array<i64: 16, 896>}, {pipeline_mode = #tpu.pipeline_mode<synchronous>, transform_indices = @transform_1, window_bounds = array<i64: 896, 128>}, {pipeline_mode = #tpu.pipeline_mode<synchronous>, transform_indices = @transform_2, window_bounds = array<i64: 1, 128>}, {pipeline_mode = #tpu.pipeline_mode<synchronous>, transform_indices = @transform_3, window_bounds = array<i64: 128, 32>}, {pipeline_mode = #tpu.pipeline_mode<synchronous>, transform_indices = @transform_4, window_bounds = array<i64: 1, 32>}, {transform_indices = @transform_5, window_bounds = array<i64: 16, 32>}]} {
    %c0 = arith.constant 0 : index
    %c0_0 = arith.constant 0 : index
    %0 = vector.load %arg1[%c0, %c0_0] : memref<16x896xbf16, #tpu.memory_space<vmem>>, vector<16x896xbf16>
    %c0_1 = arith.constant 0 : index
    %c0_2 = arith.constant 0 : index
    %1 = vector.load %arg2[%c0_1, %c0_2] : memref<896x128xbf16, #tpu.memory_space<vmem>>, vector<896x128xbf16>
    %cst = arith.constant dense<0.000000e+00> : vector<16x128xf32>
    %2 = tpu.matmul %0, %1, %cst {dimension_numbers = #tpu.dot_dimension_numbers<[1], [0], [0], [1], [0, 0, 1, 1], [], []>} : vector<16x896xbf16>, vector<896x128xbf16>, vector<16x128xf32> -> vector<16x128xf32>
    %c0_3 = arith.constant 0 : index
    %c0_4 = arith.constant 0 : index
    %3 = vector.load %arg3[%c0_3, %c0_4] : memref<1x128xf32, #tpu.memory_space<vmem>>, vector<1x128xf32>
    %4 = vector.broadcast %3 : vector<1x128xf32> to vector<16x128xf32>
    %5 = arith.addf %2, %4 : vector<16x128xf32>
    %cst_5 = arith.constant 0.000000e+00 : f32
    %6 = vector.broadcast %cst_5 : f32 to vector<16x128xf32>
    %7 = arith.maximumf %5, %6 : vector<16x128xf32>
    %8 = arith.truncf %7 : vector<16x128xf32> to vector<16x128xbf16>
    %c0_6 = arith.constant 0 : index
    %c0_7 = arith.constant 0 : index
    %9 = vector.load %arg4[%c0_6, %c0_7] : memref<128x32xbf16, #tpu.memory_space<vmem>>, vector<128x32xbf16>
    %cst_8 = arith.constant dense<0.000000e+00> : vector<16x32xf32>
    %10 = tpu.matmul %8, %9, %cst_8 {dimension_numbers = #tpu.dot_dimension_numbers<[1], [0], [0], [1], [0, 0, 1, 1], [], []>} : vector<16x128xbf16>, vector<128x32xbf16>, vector<16x32xf32> -> vector<16x32xf32>
    %c0_9 = arith.constant 0 : index
    %c0_10 = arith.constant 0 : index
    %11 = vector.load %arg5[%c0_9, %c0_10] : memref<1x32xf32, #tpu.memory_space<vmem>>, vector<1x32xf32>
    %12 = vector.broadcast %11 : vector<1x32xf32> to vector<16x32xf32>
    %13 = arith.addf %10, %12 : vector<16x32xf32>
    %c0_11 = arith.constant 0 : index
    %c0_12 = arith.constant 0 : index
    %14 = vector.load %arg6[%c0_11, %c0_12] : memref<16x32xf32, #tpu.memory_space<vmem>>, vector<16x32xf32>
    tpu.vector_store %arg6[%c0_11, %c0_12], %13 {strides = array<i32>} : memref<16x32xf32, #tpu.memory_space<vmem>>, vector<16x32xf32>,
    return
  }
  func.func @transform_0(%arg0: i32) -> (i32, i32) {
    %c0_i32 = arith.constant 0 : i32
    %c0_i32_0 = arith.constant 0 : i32
    return %arg0, %c0_i32 : i32, i32
  }
  func.func @transform_1(%arg0: i32) -> (i32, i32) {
    %c0_i32 = arith.constant 0 : i32
    %c0_i32_0 = arith.constant 0 : i32
    %c0_i32_1 = arith.constant 0 : i32
    return %c0_i32, %c0_i32_0 : i32, i32
  }
  func.func @transform_2(%arg0: i32) -> (i32, i32) {
    %c0_i32 = arith.constant 0 : i32
    %c0_i32_0 = arith.constant 0 : i32
    %c0_i32_1 = arith.constant 0 : i32
    return %c0_i32, %c0_i32_0 : i32, i32
  }
  func.func @transform_3(%arg0: i32) -> (i32, i32) {
    %c0_i32 = arith.constant 0 : i32
    %c0_i32_0 = arith.constant 0 : i32
    %c0_i32_1 = arith.constant 0 : i32
    return %c0_i32, %c0_i32_0 : i32, i32
  }
  func.func @transform_4(%arg0: i32) -> (i32, i32) {
    %c0_i32 = arith.constant 0 : i32
    %c0_i32_0 = arith.constant 0 : i32
    %c0_i32_1 = arith.constant 0 : i32
    return %c0_i32, %c0_i32_0 : i32, i32
  }
  func.func @transform_5(%arg0: i32) -> (i32, i32) {
    %c0_i32 = arith.constant 0 : i32
    %c0_i32_0 = arith.constant 0 : i32
    return %arg0, %c0_i32 : i32, i32
  }
}

</mosaic_0001>

<llo_original>
// kernel: encoder_forward.1
$region0: #{encoder_forward.1}
  #allocation0 [shape = 'u32[]', space=smem, size = 0x4, offset = 0x4, fixed_abs, tag = 'smem constant byte address 0x4 - core index']
  #allocation1 [shape = 'u32[144,128]{1,0:T(1,128)}', space=vmem, size = 0x12000, scoped, tag = 'internal scratch']
  %s0 = inlined_call_operand.vmem [shape: bf16[16,896], index: 0, kind: input, shape index: {}]
  %s1 = inlined_call_operand.hbm [shape: bf16[896,128], index: 1, kind: input, shape index: {}]
  %s2 = inlined_call_operand.vmem [shape: f32[1,128], index: 2, kind: input, shape index: {}]
  %s3 = inlined_call_operand.vmem [shape: bf16[128,32], index: 3, kind: input, shape index: {}]
  %s4 = inlined_call_operand.vmem [shape: f32[1,32], index: 4, kind: input, shape index: {}]
  %s5 = inlined_call_operand.vmem [shape: f32[16,32], index: 5, kind: output, shape index: {}]
  %s6 = sld [smem:[#allocation0]]
  $region34: #{encoder_forward.1} parent=0
    _
  %s8 = ssub.s32 1, %s6
  %s9 = scalar_select 0, %s8, %s6
  $region1: #{encoder_forward.1} parent=0
    #allocation2 [shape = 'u8[229376]{0}', space=vmem, size = 0x38000, scoped, tag = 'input window, operand 1, single buffered']
    #allocation3 [shape = 's32[1]{0}', space=sflag, size = 0x4, scoped, tag = 'scoped memory for encoder_forward.1']
    %10 = vsyncpa [#allocation3], 0
    // Predicated region
    $region2: #{encoder_forward.1} parent=1 // pred_check
      _
    $region3: #{encoder_forward.1} parent=1 // pred_check_branch
      %12 = sbr.rel (0) target = $region5
    $region4: #{encoder_forward.1} parent=1 // pred_region
      _
    $region5: #{encoder_forward.1} parent=1 // pred_fallthru
      _
    // Predicated region
    $region6: #{encoder_forward.1} parent=1 // pred_check
      _
    $region7: #{encoder_forward.1} parent=1 // pred_check_branch
      %14 = sbr.rel (0) target = $region9
    $region8: #{encoder_forward.1} parent=1 // pred_region
      %s16 = ssub.s32 7168, 7168
      %17 = vsyncadd [#allocation3], %s16
      %s18 = sshll.u32 [#allocation2], 4
      %s19 = int_to_ptr.vmem [resolvable:$true] %s18
      %24 = dma.hbm_to_vmem [thread:$0]  %s1, 7168, %s19, [#allocation3], 64, 64, 4
    $region9: #{encoder_forward.1} parent=1 // pred_fallthru
      _
    // Predicated region
    $region10: #{encoder_forward.1} parent=1 // pred_check
      _
    $region11: #{encoder_forward.1} parent=1 // pred_check_branch
      %26 = sbr.rel (0) target = $region13
    $region12: #{encoder_forward.1} parent=1 // pred_region
      _
    $region13: #{encoder_forward.1} parent=1 // pred_fallthru
      _
    // Predicated region
    $region14: #{encoder_forward.1} parent=1 // pred_check
      _
    $region15: #{encoder_forward.1} parent=1 // pred_check_branch
      %28 = sbr.rel (0) target = $region17
    $region16: #{encoder_forward.1} parent=1 // pred_region
      _
    $region17: #{encoder_forward.1} parent=1 // pred_fallthru
      _
    // Predicated region
    $region18: #{encoder_forward.1} parent=1 // pred_check
      _
    $region19: #{encoder_forward.1} parent=1 // pred_check_branch
      %30 = sbr.rel (0) target = $region21
    $region20: #{encoder_forward.1} parent=1 // pred_region
      _
    $region21: #{encoder_forward.1} parent=1 // pred_fallthru
      _
    // Predicated region
    $region22: #{encoder_forward.1} parent=1 // pred_check
      _
    $region23: #{encoder_forward.1} parent=1 // pred_check_branch
      %32 = sbr.rel (0) target = $region25
    $region24: #{encoder_forward.1} parent=1 // pred_region
      %33 = dma.done [#allocation3], 7168
    $region25: #{encoder_forward.1} parent=1 // pred_fallthru
      _
    %v35 = vld [vmem:[%s0] sm:$0xff]
    %v36 = vld [vmem:[%s0 + $0x8] sm:$0xff]
    %v37 = vld [vmem:[%s0 + $0x10] sm:$0xff]
    %v38 = vld [vmem:[%s0 + $0x18] sm:$0xf]
    %v39 = vld [vmem:[%s0 + $0x1c] sm:$0xff]
    %v40 = vld [vmem:[%s0 + $0x24] sm:$0xff]
    %v41 = vld [vmem:[%s0 + $0x2c] sm:$0xff]
    %v42 = vld [vmem:[%s0 + $0x34] sm:$0xf]
    %v43 = vld [vmem:[#allocation2] sm:$0xf]
    %v44 = vld [vmem:[#allocation2 + $0x4] sm:$0xf]
    %v45 = vld [vmem:[#allocation2 + $0x8] sm:$0xf]
    %v46 = vld [vmem:[#allocation2 + $0xc] sm:$0xf]
    %v47 = vld [vmem:[#allocation2 + $0x10] sm:$0xf]
    %v48 = vld [vmem:[#allocation2 + $0x14] sm:$0xf]
    %v49 = vld [vmem:[#allocation2 + $0x18] sm:$0xf]
    %v50 = vld [vmem:[#allocation2 + $0x1c] sm:$0xf]
    %v51 = vld [vmem:[#allocation2 + $0x20] sm:$0xf]
    %v52 = vld [vmem:[#allocation2 + $0x24] sm:$0xf]
    %v53 = vld [vmem:[#allocation2 + $0x28] sm:$0xf]
    %v54 = vld [vmem:[#allocation2 + $0x2c] sm:$0xf]
    %v55 = vld [vmem:[#allocation2 + $0x30] sm:$0xf]
    %v56 = vld [vmem:[#allocation2 + $0x34] sm:$0xf]
    %v57 = vld [vmem:[#allocation2 + $0x38] sm:$0xf]
    %v58 = vld [vmem:[#allocation2 + $0x3c] sm:$0xf]
    %v59 = vld [vmem:[#allocation2 + $0x40] sm:$0xf]
    %v60 = vld [vmem:[#allocation2 + $0x44] sm:$0xf]
    %v61 = vld [vmem:[#allocation2 + $0x48] sm:$0xf]
    %v62 = vld [vmem:[#allocation2 + $0x4c] sm:$0xf]
    %v63 = vld [vmem:[#allocation2 + $0x50] sm:$0xf]
    %v64 = vld [vmem:[#allocation2 + $0x54] sm:$0xf]
    %v65 = vld [vmem:[#allocation2 + $0x58] sm:$0xf]
    %v66 = vld [vmem:[#allocation2 + $0x5c] sm:$0xf]
    %v67 = vld [vmem:[#allocation2 + $0x60] sm:$0xf]
    %v68 = vld [vmem:[#allocation2 + $0x64] sm:$0xf]
    %v69 = vld [vmem:[#allocation2 + $0x68] sm:$0xf]
    %v70 = vld [vmem:[#allocation2 + $0x6c] sm:$0xf]
    %v71 = vld [vmem:[#allocation2 + $0x70] sm:$0xf]
    %v72 = vld [vmem:[#allocation2 + $0x74] sm:$0xf]
    %v73 = vld [vmem:[#allocation2 + $0x78] sm:$0xf]
    %v74 = vld [vmem:[#allocation2 + $0x7c] sm:$0xf]
    %v75 = vld [vmem:[#allocation2 + $0x80] sm:$0xf]
    %v76 = vld [vmem:[#allocation2 + $0x84] sm:$0xf]
    %v77 = vld [vmem:[#allocation2 + $0x88] sm:$0xf]
    %v78 = vld [vmem:[#allocation2 + $0x8c] sm:$0xf]
    %v79 = vld [vmem:[#allocation2 + $0x90] sm:$0xf]
    %v80 = vld [vmem:[#allocation2 + $0x94] sm:$0xf]
    %v81 = vld [vmem:[#allocation2 + $0x98] sm:$0xf]
    %v82 = vld [vmem:[#allocation2 + $0x9c] sm:$0xf]
    %v83 = vld [vmem:[#allocation2 + $0xa0] sm:$0xf]
    %v84 = vld [vmem:[#allocation2 + $0xa4] sm:$0xf]
    %v85 = vld [vmem:[#allocation2 + $0xa8] sm:$0xf]
    %v86 = vld [vmem:[#allocation2 + $0xac] sm:$0xf]
    %v87 = vld [vmem:[#allocation2 + $0xb0] sm:$0xf]
    %v88 = vld [vmem:[#allocation2 + $0xb4] sm:$0xf]
    %v89 = vld [vmem:[#allocation2 + $0xb8] sm:$0xf]
    %v90 = vld [vmem:[#allocation2 + $0xbc] sm:$0xf]
    %v91 = vld [vmem:[#allocation2 + $0xc0] sm:$0xf]
    %v92 = vld [vmem:[#allocation2 + $0xc4] sm:$0xf]
    %v93 = vld [vmem:[#allocation2 + $0xc8] sm:$0xf]
    %v94 = vld [vmem:[#allocation2 + $0xcc] sm:$0xf]
    %v95 = vld [vmem:[#allocation2 + $0xd0] sm:$0xf]
    %v96 = vld [vmem:[#allocation2 + $0xd4] sm:$0xf]
    %v97 = vld [vmem:[#allocation2 + $0xd8] sm:$0xf]
    %v98 = vld [vmem:[#allocation2 + $0xdc] sm:$0xf]
    %v99 = vld [vmem:[#allocation2 + $0xe0] sm:$0xf]
    %v100 = vld [vmem:[#allocation2 + $0xe4] sm:$0xf]
    %v101 = vld [vmem:[#allocation2 + $0xe8] sm:$0xf]
    %v102 = vld [vmem:[#allocation2 + $0xec] sm:$0xf]
    %v103 = vld [vmem:[#allocation2 + $0xf0] sm:$0xf]
    %v104 = vld [vmem:[#allocation2 + $0xf4] sm:$0xf]
    %v105 = vld [vmem:[#allocation2 + $0xf8] sm:$0xf]
    %v106 = vld [vmem:[#allocation2 + $0xfc] sm:$0xf]
    %v107 = vld [vmem:[#allocation2 + $0x100] sm:$0xf]
    %v108 = vld [vmem:[#allocation2 + $0x104] sm:$0xf]
    %v109 = vld [vmem:[#allocation2 + $0x108] sm:$0xf]
    %v110 = vld [vmem:[#allocation2 + $0x10c] sm:$0xf]
    %v111 = vld [vmem:[#allocation2 + $0x110] sm:$0xf]
    %v112 = vld [vmem:[#allocation2 + $0x114] sm:$0xf]
    %v113 = vld [vmem:[#allocation2 + $0x118] sm:$0xf]
    %v114 = vld [vmem:[#allocation2 + $0x11c] sm:$0xf]
    %v115 = vld [vmem:[#allocation2 + $0x120] sm:$0xf]
    %v116 = vld [vmem:[#allocation2 + $0x124] sm:$0xf]
    %v117 = vld [vmem:[#allocation2 + $0x128] sm:$0xf]
    %v118 = vld [vmem:[#allocation2 + $0x12c] sm:$0xf]
    %v119 = vld [vmem:[#allocation2 + $0x130] sm:$0xf]
    %v120 = vld [vmem:[#allocation2 + $0x134] sm:$0xf]
    %v121 = vld [vmem:[#allocation2 + $0x138] sm:$0xf]
    %v122 = vld [vmem:[#allocation2 + $0x13c] sm:$0xf]
    %v123 = vld [vmem:[#allocation2 + $0x140] sm:$0xf]
    %v124 = vld [vmem:[#allocation2 + $0x144] sm:$0xf]
    %v125 = vld [vmem:[#allocation2 + $0x148] sm:$0xf]
    %v126 = vld [vmem:[#allocation2 + $0x14c] sm:$0xf]
    %v127 = vld [vmem:[#allocation2 + $0x150] sm:$0xf]
    %v128 = vld [vmem:[#allocation2 + $0x154] sm:$0xf]
    %v129 = vld [vmem:[#allocation2 + $0x158] sm:$0xf]
    %v130 = vld [vmem:[#allocation2 + $0x15c] sm:$0xf]
    %v131 = vld [vmem:[#allocation2 + $0x160] sm:$0xf]
    %v132 = vld [vmem:[#allocation2 + $0x164] sm:$0xf]
    %v133 = vld [vmem:[#allocation2 + $0x168] sm:$0xf]
    %v134 = vld [vmem:[#allocation2 + $0x16c] sm:$0xf]
    %v135 = vld [vmem:[#allocation2 + $0x170] sm:$0xf]
    %v136 = vld [vmem:[#allocation2 + $0x174] sm:$0xf]
    %v137 = vld [vmem:[#allocation2 + $0x178] sm:$0xf]
    %v138 = vld [vmem:[#allocation2 + $0x17c] sm:$0xf]
    %v139 = vld [vmem:[#allocation2 + $0x180] sm:$0xf]
    %v140 = vld [vmem:[#allocation2 + $0x184] sm:$0xf]
    %v141 = vld [vmem:[#allocation2 + $0x188] sm:$0xf]
    %v142 = vld [vmem:[#allocation2 + $0x18c] sm:$0xf]
    %v143 = vld [vmem:[#allocation2 + $0x190] sm:$0xf]
    %v144 = vld [vmem:[#allocation2 + $0x194] sm:$0xf]
    %v145 = vld [vmem:[#allocation2 + $0x198] sm:$0xf]
    %v146 = vld [vmem:[#allocation2 + $0x19c] sm:$0xf]
    %v147 = vld [vmem:[#allocation2 + $0x1a0] sm:$0xf]
    %v148 = vld [vmem:[#allocation2 + $0x1a4] sm:$0xf]
    %v149 = vld [vmem:[#allocation2 + $0x1a8] sm:$0xf]
    %v150 = vld [vmem:[#allocation2 + $0x1ac] sm:$0xf]
    %v151 = vld [vmem:[#allocation2 + $0x1b0] sm:$0xf]
    %v152 = vld [vmem:[#allocation2 + $0x1b4] sm:$0xf]
    %v153 = vld [vmem:[#allocation2 + $0x1b8] sm:$0xf]
    %v154 = vld [vmem:[#allocation2 + $0x1bc] sm:$0xf]
    %v155 = vld [vmem:[%s2] sm:$0x1]
    %v157 = vlaneseq
    %v158 = vshrl.u32 %v157, 7
    %v159 = vsub.s32 0, %v158
    %v160 = vrot.slane %v155, %v159
    %v170 = vunpack.c.l.b16 %v35
    %v171 = vunpack.c.h.b16 %v35
    %v172 = vunpack.c.l.b16 %v36
    %v173 = vunpack.c.h.b16 %v36
    %v174 = vunpack.c.l.b16 %v37
    %v175 = vunpack.c.h.b16 %v37
    %v176 = vunpack.c.l.b16 %v38
    %v177 = vunpack.c.l.b16 %v39
    %v178 = vunpack.c.h.b16 %v39
    %v179 = vunpack.c.l.b16 %v40
    %v180 = vunpack.c.h.b16 %v40
    %v181 = vunpack.c.l.b16 %v41
    %v182 = vunpack.c.h.b16 %v41
    %v183 = vunpack.c.l.b16 %v42
    %v184 = vpack.c.b16 %v177, %v170
    %v185 = vpack.c.b16 %v178, %v171
    %v186 = vpack.c.b16 %v179, %v172
    %v187 = vpack.c.b16 %v180, %v173
    %v188 = vpack.c.b16 %v181, %v174
    %v189 = vpack.c.b16 %v182, %v175
    %v190 = vpack.c.b16 %v183, %v176
    %v310 = vunpack.c.l.b16 %v43
    %v311 = vunpack.c.l.b16 %v44
    %v312 = vunpack.c.l.b16 %v45
    %v313 = vunpack.c.l.b16 %v46
    %v314 = vunpack.c.l.b16 %v47
    %v315 = vunpack.c.l.b16 %v48
    %v316 = vunpack.c.l.b16 %v49
    %v317 = vunpack.c.l.b16 %v50
    %v318 = vunpack.c.l.b16 %v51
    %v319 = vunpack.c.l.b16 %v52
    %v320 = vunpack.c.l.b16 %v53
    %v321 = vunpack.c.l.b16 %v54
    %v322 = vunpack.c.l.b16 %v55
    %v323 = vunpack.c.l.b16 %v56
    %v324 = vunpack.c.l.b16 %v57
    %v325 = vunpack.c.l.b16 %v58
    %v326 = vunpack.c.l.b16 %v59
    %v327 = vunpack.c.l.b16 %v60
    %v328 = vunpack.c.l.b16 %v61
    %v329 = vunpack.c.l.b16 %v62
    %v330 = vunpack.c.l.b16 %v63
    %v331 = vunpack.c.l.b16 %v64
    %v332 = vunpack.c.l.b16 %v65
    %v333 = vunpack.c.l.b16 %v66
    %v334 = vunpack.c.l.b16 %v67
    %v335 = vunpack.c.l.b16 %v68
    %v336 = vunpack.c.l.b16 %v69
    %v337 = vunpack.c.l.b16 %v70
    %v338 = vunpack.c.l.b16 %v71
    %v339 = vunpack.c.l.b16 %v72
    %v340 = vunpack.c.l.b16 %v73
    %v341 = vunpack.c.l.b16 %v74
    %v342 = vunpack.c.l.b16 %v75
    %v343 = vunpack.c.l.b16 %v76
    %v344 = vunpack.c.l.b16 %v77
    %v345 = vunpack.c.l.b16 %v78
    %v346 = vunpack.c.l.b16 %v79
    %v347 = vunpack.c.l.b16 %v80
    %v348 = vunpack.c.l.b16 %v81
    %v349 = vunpack.c.l.b16 %v82
    %v350 = vunpack.c.l.b16 %v83
    %v351 = vunpack.c.l.b16 %v84
    %v352 = vunpack.c.l.b16 %v85
    %v353 = vunpack.c.l.b16 %v86
    %v354 = vunpack.c.l.b16 %v87
    %v355 = vunpack.c.l.b16 %v88
    %v356 = vunpack.c.l.b16 %v89
    %v357 = vunpack.c.l.b16 %v90
    %v358 = vunpack.c.l.b16 %v91
    %v359 = vunpack.c.l.b16 %v92
    %v360 = vunpack.c.l.b16 %v93
    %v361 = vunpack.c.l.b16 %v94
    %v362 = vunpack.c.l.b16 %v95
    %v363 = vunpack.c.l.b16 %v96
    %v364 = vunpack.c.l.b16 %v97
    %v365 = vunpack.c.l.b16 %v98
    %v366 = vunpack.c.l.b16 %v99
    %v367 = vunpack.c.l.b16 %v100
    %v368 = vunpack.c.l.b16 %v101
    %v369 = vunpack.c.l.b16 %v102
    %v370 = vunpack.c.l.b16 %v103
    %v371 = vunpack.c.l.b16 %v104
    %v372 = vunpack.c.l.b16 %v105
    %v373 = vunpack.c.l.b16 %v106
    %v374 = vunpack.c.l.b16 %v107
    %v375 = vunpack.c.l.b16 %v108
    %v376 = vunpack.c.l.b16 %v109
    %v377 = vunpack.c.l.b16 %v110
    %v378 = vunpack.c.l.b16 %v111
    %v379 = vunpack.c.l.b16 %v112
    %v380 = vunpack.c.l.b16 %v113
    %v381 = vunpack.c.l.b16 %v114
    %v382 = vunpack.c.l.b16 %v115
    %v383 = vunpack.c.l.b16 %v116
    %v384 = vunpack.c.l.b16 %v117
    %v385 = vunpack.c.l.b16 %v118
    %v386 = vunpack.c.l.b16 %v119
    %v387 = vunpack.c.l.b16 %v120
    %v388 = vunpack.c.l.b16 %v121
    %v389 = vunpack.c.l.b16 %v122
    %v390 = vunpack.c.l.b16 %v123
    %v391 = vunpack.c.l.b16 %v124
    %v392 = vunpack.c.l.b16 %v125
    %v393 = vunpack.c.l.b16 %v126
    %v394 = vunpack.c.l.b16 %v127
    %v395 = vunpack.c.l.b16 %v128
    %v396 = vunpack.c.l.b16 %v129
    %v397 = vunpack.c.l.b16 %v130
    %v398 = vunpack.c.l.b16 %v131
    %v399 = vunpack.c.l.b16 %v132
    %v400 = vunpack.c.l.b16 %v133
    %v401 = vunpack.c.l.b16 %v134
    %v402 = vunpack.c.l.b16 %v135
    %v403 = vunpack.c.l.b16 %v136
    %v404 = vunpack.c.l.b16 %v137
    %v405 = vunpack.c.l.b16 %v138
    %v406 = vunpack.c.l.b16 %v139
    %v407 = vunpack.c.l.b16 %v140
    %v408 = vunpack.c.l.b16 %v141
    %v409 = vunpack.c.l.b16 %v142
    %v410 = vunpack.c.l.b16 %v143
    %v411 = vunpack.c.l.b16 %v144
    %v412 = vunpack.c.l.b16 %v145
    %v413 = vunpack.c.l.b16 %v146
    %v414 = vunpack.c.l.b16 %v147
    %v415 = vunpack.c.l.b16 %v148
    %v416 = vunpack.c.l.b16 %v149
    %v417 = vunpack.c.l.b16 %v150
    %v418 = vunpack.c.l.b16 %v151
    %v419 = vunpack.c.l.b16 %v152
    %v420 = vunpack.c.l.b16 %v153
    %v421 = vunpack.c.l.b16 %v154
    %v422 = vpack.c.b16 %v311, %v310
    %v423 = vpack.c.b16 %v313, %v312
    %v424 = vpack.c.b16 %v315, %v314
    %v425 = vpack.c.b16 %v317, %v316
    %v426 = vpack.c.b16 %v319, %v318
    %v427 = vpack.c.b16 %v321, %v320
    %v428 = vpack.c.b16 %v323, %v322
    %v429 = vpack.c.b16 %v325, %v324
    %v430 = vpack.c.b16 %v327, %v326
    %v431 = vpack.c.b16 %v329, %v328
    %v432 = vpack.c.b16 %v331, %v330
    %v433 = vpack.c.b16 %v333, %v332
    %v434 = vpack.c.b16 %v335, %v334
    %v435 = vpack.c.b16 %v337, %v336
    %v436 = vpack.c.b16 %v339, %v338
    %v437 = vpack.c.b16 %v341, %v340
    %v438 = vpack.c.b16 %v343, %v342
    %v439 = vpack.c.b16 %v345, %v344
    %v440 = vpack.c.b16 %v347, %v346
    %v441 = vpack.c.b16 %v349, %v348
    %v442 = vpack.c.b16 %v351, %v350
    %v443 = vpack.c.b16 %v353, %v352
    %v444 = vpack.c.b16 %v355, %v354
    %v445 = vpack.c.b16 %v357, %v356
    %v446 = vpack.c.b16 %v359, %v358
    %v447 = vpack.c.b16 %v361, %v360
    %v448 = vpack.c.b16 %v363, %v362
    %v449 = vpack.c.b16 %v365, %v364
    %v450 = vpack.c.b16 %v367, %v366
    %v451 = vpack.c.b16 %v369, %v368
    %v452 = vpack.c.b16 %v371, %v370
    %v453 = vpack.c.b16 %v373, %v372
    %v454 = vpack.c.b16 %v375, %v374
    %v455 = vpack.c.b16 %v377, %v376
    %v456 = vpack.c.b16 %v379, %v378
    %v457 = vpack.c.b16 %v381, %v380
    %v458 = vpack.c.b16 %v383, %v382
    %v459 = vpack.c.b16 %v385, %v384
    %v460 = vpack.c.b16 %v387, %v386
    %v461 = vpack.c.b16 %v389, %v388
    %v462 = vpack.c.b16 %v391, %v390
    %v463 = vpack.c.b16 %v393, %v392
    %v464 = vpack.c.b16 %v395, %v394
    %v465 = vpack.c.b16 %v397, %v396
    %v466 = vpack.c.b16 %v399, %v398
    %v467 = vpack.c.b16 %v401, %v400
    %v468 = vpack.c.b16 %v403, %v402
    %v469 = vpack.c.b16 %v405, %v404
    %v470 = vpack.c.b16 %v407, %v406
    %v471 = vpack.c.b16 %v409, %v408
    %v472 = vpack.c.b16 %v411, %v410
    %v473 = vpack.c.b16 %v413, %v412
    %v474 = vpack.c.b16 %v415, %v414
    %v475 = vpack.c.b16 %v417, %v416
    %v476 = vpack.c.b16 %v419, %v418
    %v477 = vpack.c.b16 %v421, %v420
    %534 = vmatprep.subr.bf16.mxu0 0
    %535 = vmatpush1.bf16.msra.mxu0 %v422
    %536 = vmatprep.subr.bf16.mxu0 0
    %537 = vmatpush1.bf16.msra.mxu0 %v423
    %538 = vmatprep.subr.bf16.mxu0 0
    %539 = vmatpush1.bf16.msra.mxu0 %v424
    %540 = vmatprep.subr.bf16.mxu0 0
    %541 = vmatpush1.bf16.msra.mxu0 %v425
    %542 = vmatprep.subr.bf16.mxu0 0
    %543 = vmatpush1.bf16.msra.mxu0 %v426
    %544 = vmatprep.subr.bf16.mxu0 0
    %545 = vmatpush1.bf16.msra.mxu0 %v427
    %546 = vmatprep.subr.bf16.mxu0 0
    %547 = vmatpush1.bf16.msra.mxu0 %v428
    %548 = vmatprep.subr.bf16.mxu0 0
    %549 = vmatpush1.bf16.msra.mxu0 %v429
    %550 = vmatprep.subr.bf16.mxu0 0
    %551 = vmatpush1.bf16.msra.mxu0 %v430
    %552 = vmatprep.subr.bf16.mxu0 0
    %553 = vmatpush1.bf16.msra.mxu0 %v431
    %554 = vmatprep.subr.bf16.mxu0 0
    %555 = vmatpush1.bf16.msra.mxu0 %v432
    %556 = vmatprep.subr.bf16.mxu0 0
    %557 = vmatpush1.bf16.msra.mxu0 %v433
    %558 = vmatprep.subr.bf16.mxu0 0
    %559 = vmatpush1.bf16.msra.mxu0 %v434
    %560 = vmatprep.subr.bf16.mxu0 0
    %561 = vmatpush1.bf16.msra.mxu0 %v435
    %562 = vmatprep.subr.bf16.mxu0 0
    %563 = vmatpush1.bf16.msra.mxu0 %v436
    %564 = vmatprep.subr.bf16.mxu0 0
    %565 = vmatpush1.bf16.msra.mxu0 %v437
    %566 = vmatprep.mubr.bf16.mxu0 %v185
    %567 = vmatmul.mubr.bf16.gmra.mrb[0].mxu0 %v184
    %v568 = vpop.f32.mrb[0].mxu0
    %v569 = vadd.f32 %v160, %v568
    %v570 = vpop.f32.mrb[0].mxu0
    %v571 = vpop.f32.mrb[0].mxu0
    %v572 = vadd.f32 %v160, %v571
    %v573 = vpop.f32.mrb[0].mxu0
    %574 = vdwg.mxu0
    %575 = vmatprep.subr.bf16.mxu0 0
    %576 = vmatpush1.bf16.msra.mxu0 %v438
    %577 = vmatprep.subr.bf16.mxu0 0
    %578 = vmatpush1.bf16.msra.mxu0 %v439
    %579 = vmatprep.subr.bf16.mxu0 0
    %580 = vmatpush1.bf16.msra.mxu0 %v440
    %581 = vmatprep.subr.bf16.mxu0 0
    %582 = vmatpush1.bf16.msra.mxu0 %v441
    %583 = vmatprep.subr.bf16.mxu0 0
    %584 = vmatpush1.bf16.msra.mxu0 %v442
    %585 = vmatprep.subr.bf16.mxu0 0
    %586 = vmatpush1.bf16.msra.mxu0 %v443
    %587 = vmatprep.subr.bf16.mxu0 0
    %588 = vmatpush1.bf16.msra.mxu0 %v444
    %589 = vmatprep.subr.bf16.mxu0 0
    %590 = vmatpush1.bf16.msra.mxu0 %v445
    %591 = vmatprep.subr.bf16.mxu0 0
    %592 = vmatpush1.bf16.msra.mxu0 %v446
    %593 = vmatprep.subr.bf16.mxu0 0
    %594 = vmatpush1.bf16.msra.mxu0 %v447
    %595 = vmatprep.subr.bf16.mxu0 0
    %596 = vmatpush1.bf16.msra.mxu0 %v448
    %597 = vmatprep.subr.bf16.mxu0 0
    %598 = vmatpush1.bf16.msra.mxu0 %v449
    %599 = vmatprep.subr.bf16.mxu0 0
    %600 = vmatpush1.bf16.msra.mxu0 %v450
    %601 = vmatprep.subr.bf16.mxu0 0
    %602 = vmatpush1.bf16.msra.mxu0 %v451
    %603 = vmatprep.subr.bf16.mxu0 0
    %604 = vmatpush1.bf16.msra.mxu0 %v452
    %605 = vmatprep.subr.bf16.mxu0 0
    %606 = vmatpush1.bf16.msra.mxu0 %v453
    %607 = vmatprep.mubr.bf16.mxu0 %v187
    %608 = vmatmul.mubr.bf16.gmra.mrb[0].mxu0 %v186
    %v609 = vpop.f32.mrb[0].mxu0
    %v610 = vadd.f32 %v569, %v609
    %v611 = vpop.f32.mrb[0].mxu0
    %v612 = vpop.f32.mrb[0].mxu0
    %v613 = vadd.f32 %v572, %v612
    %v614 = vpop.f32.mrb[0].mxu0
    %615 = vdwg.mxu0
    %616 = vmatprep.subr.bf16.mxu0 0
    %617 = vmatpush1.bf16.msra.mxu0 %v454
    %618 = vmatprep.subr.bf16.mxu0 0
    %619 = vmatpush1.bf16.msra.mxu0 %v455
    %620 = vmatprep.subr.bf16.mxu0 0
    %621 = vmatpush1.bf16.msra.mxu0 %v456
    %622 = vmatprep.subr.bf16.mxu0 0
    %623 = vmatpush1.bf16.msra.mxu0 %v457
    %624 = vmatprep.subr.bf16.mxu0 0
    %625 = vmatpush1.bf16.msra.mxu0 %v458
    %626 = vmatprep.subr.bf16.mxu0 0
    %627 = vmatpush1.bf16.msra.mxu0 %v459
    %628 = vmatprep.subr.bf16.mxu0 0
    %629 = vmatpush1.bf16.msra.mxu0 %v460
    %630 = vmatprep.subr.bf16.mxu0 0
    %631 = vmatpush1.bf16.msra.mxu0 %v461
    %632 = vmatprep.subr.bf16.mxu0 0
    %633 = vmatpush1.bf16.msra.mxu0 %v462
    %634 = vmatprep.subr.bf16.mxu0 0
    %635 = vmatpush1.bf16.msra.mxu0 %v463
    %636 = vmatprep.subr.bf16.mxu0 0
    %637 = vmatpush1.bf16.msra.mxu0 %v464
    %638 = vmatprep.subr.bf16.mxu0 0
    %639 = vmatpush1.bf16.msra.mxu0 %v465
    %640 = vmatprep.subr.bf16.mxu0 0
    %641 = vmatpush1.bf16.msra.mxu0 %v466
    %642 = vmatprep.subr.bf16.mxu0 0
    %643 = vmatpush1.bf16.msra.mxu0 %v467
    %644 = vmatprep.subr.bf16.mxu0 0
    %645 = vmatpush1.bf16.msra.mxu0 %v468
    %646 = vmatprep.subr.bf16.mxu0 0
    %647 = vmatpush1.bf16.msra.mxu0 %v469
    %648 = vmatprep.mubr.bf16.mxu0 %v189
    %649 = vmatmul.mubr.bf16.gmra.mrb[0].mxu0 %v188
    %v650 = vpop.f32.mrb[0].mxu0
    %v651 = vadd.f32 %v610, %v650
    %v652 = vpop.f32.mrb[0].mxu0
    %v653 = vpop.f32.mrb[0].mxu0
    %v654 = vadd.f32 %v613, %v653
    %v655 = vpop.f32.mrb[0].mxu0
    %656 = vdwg.mxu0
    %657 = vmatprep.subr.bf16.mxu0 0
    %658 = vmatpush1.bf16.msra.mxu0 %v470
    %659 = vmatprep.subr.bf16.mxu0 0
    %660 = vmatpush1.bf16.msra.mxu0 %v471
    %661 = vmatprep.subr.bf16.mxu0 0
    %662 = vmatpush1.bf16.msra.mxu0 %v472
    %663 = vmatprep.subr.bf16.mxu0 0
    %664 = vmatpush1.bf16.msra.mxu0 %v473
    %665 = vmatprep.subr.bf16.mxu0 0
    %666 = vmatpush1.bf16.msra.mxu0 %v474
    %667 = vmatprep.subr.bf16.mxu0 0
    %668 = vmatpush1.bf16.msra.mxu0 %v475
    %669 = vmatprep.subr.bf16.mxu0 0
    %670 = vmatpush1.bf16.msra.mxu0 %v476
    %671 = vmatprep.subr.bf16.mxu0 0
    %672 = vmatpush1.bf16.msra.mxu0 %v477
    %673 = vmatprep.subr.bf16.mxu0 0
    %674 = vmatpush1.bf16.msra.mxu0 0
    %675 = vmatprep.subr.bf16.mxu0 0
    %676 = vmatpush1.bf16.msra.mxu0 0
    %677 = vmatprep.subr.bf16.mxu0 0
    %678 = vmatpush1.bf16.msra.mxu0 0
    %679 = vmatprep.subr.bf16.mxu0 0
    %680 = vmatpush1.bf16.msra.mxu0 0
    %681 = vmatprep.subr.bf16.mxu0 0
    %682 = vmatpush1.bf16.msra.mxu0 0
    %683 = vmatprep.subr.bf16.mxu0 0
    %684 = vmatpush1.bf16.msra.mxu0 0
    %685 = vmatprep.subr.bf16.mxu0 0
    %686 = vmatpush1.bf16.msra.mxu0 0
    %687 = vmatprep.subr.bf16.mxu0 0
    %688 = vmatpush1.bf16.msra.mxu0 0
    %689 = vmatprep.mubr.bf16.mxu0 0
    %690 = vmatmul.mubr.bf16.gmra.mrb[0].mxu0 %v190
    %v691 = vpop.f32.mrb[0].mxu0
    %v692 = vadd.f32 %v651, %v691
    %v693 = vpop.f32.mrb[0].mxu0
    %v694 = vpop.f32.mrb[0].mxu0
    %v695 = vadd.f32 %v654, %v694
    %v696 = vpop.f32.mrb[0].mxu0
    %697 = vdwg.mxu0
    %v698 = vmax.f32 %v692, 0.0
    %v699 = vmax.f32 %v695, 0.0
    %v700 = vpack.c.bf16 %v699, %v698
    %v701 = vld [vmem:[%s3] sm:$0xf]
    %v702 = vld [vmem:[%s3 + $0x4] sm:$0xf]
    %v703 = vld [vmem:[%s3 + $0x8] sm:$0xf]
    %v704 = vld [vmem:[%s3 + $0xc] sm:$0xf]
    %v705 = vld [vmem:[%s3 + $0x10] sm:$0xf]
    %v706 = vld [vmem:[%s3 + $0x14] sm:$0xf]
    %v707 = vld [vmem:[%s3 + $0x18] sm:$0xf]
    %v708 = vld [vmem:[%s3 + $0x1c] sm:$0xf]
    %v709 = vld [vmem:[%s3 + $0x20] sm:$0xf]
    %v710 = vld [vmem:[%s3 + $0x24] sm:$0xf]
    %v711 = vld [vmem:[%s3 + $0x28] sm:$0xf]
    %v712 = vld [vmem:[%s3 + $0x2c] sm:$0xf]
    %v713 = vld [vmem:[%s3 + $0x30] sm:$0xf]
    %v714 = vld [vmem:[%s3 + $0x34] sm:$0xf]
    %v715 = vld [vmem:[%s3 + $0x38] sm:$0xf]
    %v716 = vld [vmem:[%s3 + $0x3c] sm:$0xf]
    %v717 = vld [vmem:[%s4] sm:$0x1]
    %v719 = vlaneseq
    %v720 = vshrl.u32 %v719, 7
    %v721 = vsub.s32 0, %v720
    %v722 = vrot.slane %v717, %v721
    %v740 = vunpack.c.l.b16 %v701
    %v741 = vunpack.c.l.b16 %v702
    %v742 = vunpack.c.l.b16 %v703
    %v743 = vunpack.c.l.b16 %v704
    %v744 = vunpack.c.l.b16 %v705
    %v745 = vunpack.c.l.b16 %v706
    %v746 = vunpack.c.l.b16 %v707
    %v747 = vunpack.c.l.b16 %v708
    %v748 = vunpack.c.l.b16 %v709
    %v749 = vunpack.c.l.b16 %v710
    %v750 = vunpack.c.l.b16 %v711
    %v751 = vunpack.c.l.b16 %v712
    %v752 = vunpack.c.l.b16 %v713
    %v753 = vunpack.c.l.b16 %v714
    %v754 = vunpack.c.l.b16 %v715
    %v755 = vunpack.c.l.b16 %v716
    %v756 = vpack.c.b16 %v741, %v740
    %v757 = vpack.c.b16 %v743, %v742
    %v758 = vpack.c.b16 %v745, %v744
    %v759 = vpack.c.b16 %v747, %v746
    %v760 = vpack.c.b16 %v749, %v748
    %v761 = vpack.c.b16 %v751, %v750
    %v762 = vpack.c.b16 %v753, %v752
    %v763 = vpack.c.b16 %v755, %v754
    %772 = vmatprep.subr.bf16.mxu0 0
    %773 = vmatpush1.bf16.msra.mxu0 %v756
    %774 = vmatprep.subr.bf16.mxu0 0
    %775 = vmatpush1.bf16.msra.mxu0 %v757
    %776 = vmatprep.subr.bf16.mxu0 0
    %777 = vmatpush1.bf16.msra.mxu0 %v758
    %778 = vmatprep.subr.bf16.mxu0 0
    %779 = vmatpush1.bf16.msra.mxu0 %v759
    %780 = vmatprep.subr.bf16.mxu0 0
    %781 = vmatpush1.bf16.msra.mxu0 %v760
    %782 = vmatprep.subr.bf16.mxu0 0
    %783 = vmatpush1.bf16.msra.mxu0 %v761
    %784 = vmatprep.subr.bf16.mxu0 0
    %785 = vmatpush1.bf16.msra.mxu0 %v762
    %786 = vmatprep.subr.bf16.mxu0 0
    %787 = vmatpush1.bf16.msra.mxu0 %v763
    %788 = vmatprep.subr.bf16.mxu0 0
    %789 = vmatpush1.bf16.msra.mxu0 0
    %790 = vmatprep.subr.bf16.mxu0 0
    %791 = vmatpush1.bf16.msra.mxu0 0
    %792 = vmatprep.subr.bf16.mxu0 0
    %793 = vmatpush1.bf16.msra.mxu0 0
    %794 = vmatprep.subr.bf16.mxu0 0
    %795 = vmatpush1.bf16.msra.mxu0 0
    %796 = vmatprep.subr.bf16.mxu0 0
    %797 = vmatpush1.bf16.msra.mxu0 0
    %798 = vmatprep.subr.bf16.mxu0 0
    %799 = vmatpush1.bf16.msra.mxu0 0
    %800 = vmatprep.subr.bf16.mxu0 0
    %801 = vmatpush1.bf16.msra.mxu0 0
    %802 = vmatprep.subr.bf16.mxu0 0
    %803 = vmatpush1.bf16.msra.mxu0 0
    %804 = vmatprep.mubr.bf16.mxu0 0
    %805 = vmatmul.mubr.bf16.gmra.mrb[0].mxu0 %v700
    %v806 = vpop.f32.mrb[0].mxu0
    %v807 = vadd.f32 %v722, %v806
    %v808 = vpop.f32.mrb[0].mxu0
    %v809 = vpop.f32.mrb[0].mxu0
    %v810 = vadd.f32 %v722, %v809
    %v811 = vpop.f32.mrb[0].mxu0
    %812 = vdwg.mxu0
    %vm813 = vcmask 261120
    %814 = vst.msk [vmem:[%s5] sm:$0xff] %vm813, %v807
    %815 = vst.msk [vmem:[%s5 + $0x8] sm:$0xff] %vm813, %v810
    // Predicated region
    $region26: #{encoder_forward.1} parent=1 // pred_check
      _
    $region27: #{encoder_forward.1} parent=1 // pred_check_branch
      %817 = sbr.rel (0) target = $region29
    $region28: #{encoder_forward.1} parent=1 // pred_region
      _
    $region29: #{encoder_forward.1} parent=1 // pred_fallthru
      _
    // Predicated region
    $region30: #{encoder_forward.1} parent=1 // pred_check
      _
    $region31: #{encoder_forward.1} parent=1 // pred_check_branch
      %819 = sbr.rel (0) target = $region33
    $region32: #{encoder_forward.1} parent=1 // pred_region
      _
    $region33: #{encoder_forward.1} parent=1 // pred_fallthru
      _
    %820 = vsyncpa [#allocation3], 1

</llo_original>
